<compile_context>
chip_gen: v6e
topology: v6e:2x2x1
jax: 0.10.0
libtpu: 0.0.40
codegen_flags: <defaults>
</compile_context>

<pallas_src>
import functools

import jax
import jax.numpy as jnp
from jax.experimental import pallas as pl
from jax.experimental.pallas import tpu as pltpu


def _round_up(x, m):
    return ((x + m - 1) // m) * m


def _largest_aligned_divisor(total, quantum, cap):
    """Largest d <= cap with total % d == 0 and d % quantum == 0 (total % quantum == 0)."""
    cap = max(quantum, min(cap, total))
    best = quantum
    for d in range(quantum, cap + 1, quantum):
        if total % d == 0:
            best = d
    return best


# ----------------------------------------------------------------------------
# Kernels
# ----------------------------------------------------------------------------
def _qlinear_small_kernel(x_ref, w_ref, b_ref, o_ref):
    # Whole problem in VMEM: single MXU matmul + bias.
    acc = jnp.dot(x_ref[...], w_ref[...], preferred_element_type=jnp.float32)
    o_ref[...] = (acc + b_ref[...]).astype(o_ref.dtype)


def _qlinear_kernel_direct(x_ref, w_ref, b_ref, o_ref):
    # f32 output: accumulate directly into the resident output block.
    k = pl.program_id(2)

    @pl.when(k == 0)
    def _():
        o_ref[...] = jnp.broadcast_to(b_ref[...], o_ref.shape)

    o_ref[...] += jnp.dot(x_ref[...], w_ref[...],
                          preferred_element_type=jnp.float32)


def _qlinear_kernel_accum(x_ref, w_ref, b_ref, o_ref, acc_ref):
    # Narrow output dtype: f32 VMEM accumulator + cast epilogue.
    k = pl.program_id(2)

    @pl.when(k == 0)
    def _():
        acc_ref[...] = jnp.broadcast_to(b_ref[...], acc_ref.shape)

    acc_ref[...] += jnp.dot(x_ref[...], w_ref[...],
                            preferred_element_type=jnp.float32)

    @pl.when(k == pl.num_programs(2) - 1)
    def _():
        o_ref[...] = acc_ref[...].astype(o_ref.dtype)


# ----------------------------------------------------------------------------
# Wrapper
# ----------------------------------------------------------------------------
def prepare_qlinear_params(weight, bias, compute_dtype=jnp.float32):
    """One-time prep of nn.Linear params.

    weight: [F_out, F_in] (PyTorch convention) -> returned as [F_in, F_out]
            cast to compute_dtype (pay the transpose + cast once, not per call).
    bias:   [F_out] -> kept in float32 (added in the f32 accumulator).
    """
    weight_t = jnp.asarray(weight).T.astype(compute_dtype)
    bias_f32 = jnp.asarray(bias).astype(jnp.float32)
    return weight_t, bias_f32


@functools.partial(jax.jit, static_argnames=("tm", "tn", "tk",
                                             "vmem_limit_bytes"))
def qlayer_forward(x, weight_t, bias, *, tm=256, tn=256, tk=1024,
                   vmem_limit_bytes=32 * 1024 * 1024):
    """Pallas equivalent of QLayer(nn.Linear(F_in, F_out)).forward(x).

    x:        [..., F_in]
    weight_t: [F_in, F_out]  (from prepare_qlinear_params; may be bf16)
    bias:     [F_out]        float32
    returns   [..., F_out]   in x.dtype
    """
    orig_shape = x.shape
    F_in = orig_shape[-1]
    F_in_w, F_out = weight_t.shape
    assert F_in_w == F_in, "weight_t must be [F_in, F_out]"

    out_dtype = x.dtype
    compute_dtype = weight_t.dtype

    x2 = x.reshape(-1, F_in).astype(compute_dtype)
    B = x2.shape[0]
    b2 = bias.reshape(1, F_out).astype(jnp.float32)

    csz = jnp.dtype(compute_dtype).itemsize
    osz = jnp.dtype(out_dtype).itemsize

    # ---- tiny-problem fast path: whole arrays in VMEM, no padding, no grid ----
    footprint = (B * F_in + F_in * F_out + F_out) * csz + B * F_out * osz
    if footprint <= (1 << 20):
        out = pl.pallas_call(
            _qlinear_small_kernel,
            out_shape=jax.ShapeDtypeStruct((B, F_out), out_dtype),
        )(x2, weight_t, b2)
        return out.reshape(*orig_shape[:-1], F_out)

    # ---- tiled path ----------------------------------------------------------
    # bf16 packs 2 rows per sublane -> pad M to 16; f32 -> 8.
    sublane = 16 if compute_dtype == jnp.bfloat16 else 8
    Bp = _round_up(B, sublane)
    Kp = _round_up(F_in, 128)
    Np = _round_up(F_out, 128)

    # Tiles divide the aligned dims exactly (no K/N re-padding to tile multiples).
    if Bp <= 256:
        tm = Bp                      # small-batch / weight-streaming regime
    else:
        tm = _largest_aligned_divisor(Bp, sublane, tm)
    tn = _largest_aligned_divisor(Np, 128, tn)
    tk = _largest_aligned_divisor(Kp, 128, tk)

    grid_m, grid_n, grid_k = Bp // tm, Np // tn, Kp // tk

    # v7x has 2 TensorCores: make sure at least one parallel axis has >=2 blocks.
    if grid_m == 1 and grid_n == 1 and Np % 256 == 0:
        tn = Np // 2
        grid_n = 2

    # Zero-pad (keeps boundary K blocks mathematically inert in the accumulator).
    x_p = x2 if (Bp, Kp) == (B, F_in) else jnp.pad(
        x2, ((0, Bp - B), (0, Kp - F_in)))
    w_p = weight_t if (Kp, Np) == (F_in, F_out) else jnp.pad(
        weight_t, ((0, Kp - F_in), (0, Np - F_out)))
    b_p = b2 if Np == F_out else jnp.pad(b2, ((0, 0), (0, Np - F_out)))

    # f32 output -> accumulate directly into o_ref; otherwise use f32 scratch.
    direct = jnp.dtype(out_dtype) == jnp.dtype(jnp.float32)
    kernel = _qlinear_kernel_direct if direct else _qlinear_kernel_accum
    scratch = [] if direct else [pltpu.VMEM((tm, tn), jnp.float32)]

    # Weight-streaming regime: deepen the weight pipeline to hide HBM DMA.
    w_spec_kwargs = {}
    if grid_m == 1 and grid_n * grid_k >= 3:
        w_spec_kwargs["pipeline_mode"] = pl.Buffered(3)

    in_specs = [
        pl.BlockSpec((tm, tk), lambda i, j, k: (i, k)),                    # x
        pl.BlockSpec((tk, tn), lambda i, j, k: (k, j), **w_spec_kwargs),   # W^T
        pl.BlockSpec((1, tn), lambda i, j, k: (0, j)),                     # bias
    ]

    cost = pl.CostEstimate(
        flops=2 * Bp * Kp * Np,
        transcendentals=0,
        bytes_accessed=(Bp * Kp * csz * grid_n      # x re-streamed per N block
                        + Kp * Np * csz * grid_m    # W re-streamed per M block
                        + Np * 4 * grid_m           # bias per M block
                        + Bp * Np * osz))           # output written once

    out_p = pl.pallas_call(
        kernel,
        out_shape=jax.ShapeDtypeStruct((Bp, Np), out_dtype),
        grid=(grid_m, grid_n, grid_k),
        in_specs=in_specs,
        out_specs=pl.BlockSpec((tm, tn), lambda i, j, k: (i, j)),
        scratch_shapes=scratch,
        compiler_params=pltpu.CompilerParams(
            dimension_semantics=("parallel", "parallel", "arbitrary"),
            vmem_limit_bytes=vmem_limit_bytes,   # safe on v5e/v6e/v7x (64 MiB/TC)
        ),
        cost_estimate=cost,
    )(x_p, w_p, b_p)

    if (Bp, Np) != (B, F_out):
        out_p = out_p[:B, :F_out]
    return out_p.reshape(*orig_shape[:-1], F_out)


# ----------------------------------------------------------------------------
# Demo / self-check
# ----------------------------------------------------------------------------
if __name__ == "__main__":
    key = jax.random.PRNGKey(0)

    def make_inputs(k, batch, f_in, f_out):
        kx, kw, kb = jax.random.split(k, 3)
        x = jax.random.normal(kx, (batch, f_in), dtype=jnp.float32)
        bound = 1.0 / jnp.sqrt(f_in)
        w = jax.random.uniform(kw, (f_out, f_in), minval=-bound, maxval=bound,
                               dtype=jnp.float32)  # PyTorch [F_out, F_in]
        b = jax.random.uniform(kb, (f_out,), minval=-bound, maxval=bound,
                               dtype=jnp.float32)
        return x, w, b

    # 1) Small quantum-layer-sized problem -> single-block fast path.
    k1, k2 = jax.random.split(key)
    x, w, b = make_inputs(k1, batch=8, f_in=32, f_out=32)
    w_t, b_f = prepare_qlinear_params(w, b)
    out = jax.block_until_ready(qlayer_forward(x, w_t, b_f))
    ref = x @ w.T + b
    assert out.shape == (8, 32)
    assert jnp.allclose(out, ref, atol=1e-5, rtol=1e-5)

    # 2) Larger problem -> tiled (M, N, K) grid, f32 direct accumulation.
    xl, wl, bl = make_inputs(k2, batch=32, f_in=1024, f_out=768)
    wl_t, bl_f = prepare_qlinear_params(wl, bl)
    out_l = jax.block_until_ready(qlayer_forward(xl, wl_t, bl_f))
    ref_l = xl @ wl.T + bl
    assert out_l.shape == (32, 768)
    assert jnp.allclose(out_l, ref_l, atol=1e-4, rtol=1e-4)

    # 3) Same problem with cached bf16 weights (f32 accumulation in-kernel).
    wl_bt, bl_bf = prepare_qlinear_params(wl, bl, compute_dtype=jnp.bfloat16)
    out_bf = jax.block_until_ready(qlayer_forward(xl, wl_bt, bl_bf))
    assert out_bf.shape == (32, 768)
    assert jnp.allclose(out_bf, ref_l, atol=5e-2, rtol=5e-2)

    # TODO(synk): QNodeFunction.backward (SPSA finite-difference gradients with
    # in-place parameter perturbation) is a custom autograd rule, not part of
    # the forward pass; not implemented here.
    print("KERNEL_OK")
</pallas_src>

<mosaic_0001>
module attributes {stable_mosaic.version = 11 : i64} {
  func.func @_qlinear_small_kernel(%arg0: memref<8x32xf32, #tpu.memory_space<vmem>>, %arg1: memref<32x32xf32, #tpu.memory_space<vmem>>, %arg2: memref<1x32xf32, #tpu.memory_space<vmem>>, %arg3: memref<8x32xf32, #tpu.memory_space<vmem>>) attributes {dimension_semantics = [], scalar_prefetch = 0 : i64, scratch_operands = 0 : i64, tpu.core_type = #tpu.core_type<tc>} {
    %c0 = arith.constant 0 : index
    %c0_0 = arith.constant 0 : index
    %0 = vector.load %arg0[%c0, %c0_0] : memref<8x32xf32, #tpu.memory_space<vmem>>, vector<8x32xf32>
    %c0_1 = arith.constant 0 : index
    %c0_2 = arith.constant 0 : index
    %1 = vector.load %arg1[%c0_1, %c0_2] : memref<32x32xf32, #tpu.memory_space<vmem>>, vector<32x32xf32>
    %cst = arith.constant dense<0.000000e+00> : vector<8x32xf32>
    %2 = tpu.matmul %0, %1, %cst {dimension_numbers = #tpu.dot_dimension_numbers<[1], [0], [0], [1], [0, 0, 1, 1], [], []>} : vector<8x32xf32>, vector<32x32xf32>, vector<8x32xf32> -> vector<8x32xf32>
    %c0_3 = arith.constant 0 : index
    %c0_4 = arith.constant 0 : index
    %3 = vector.load %arg2[%c0_3, %c0_4] : memref<1x32xf32, #tpu.memory_space<vmem>>, vector<1x32xf32>
    %4 = vector.broadcast %3 : vector<1x32xf32> to vector<8x32xf32>
    %5 = arith.addf %2, %4 : vector<8x32xf32>
    %c0_5 = arith.constant 0 : index
    %c0_6 = arith.constant 0 : index
    %6 = vector.load %arg3[%c0_5, %c0_6] : memref<8x32xf32, #tpu.memory_space<vmem>>, vector<8x32xf32>
    tpu.vector_store %arg3[%c0_5, %c0_6], %5 {strides = array<i32>} : memref<8x32xf32, #tpu.memory_space<vmem>>, vector<8x32xf32>,
    return
  }
}

</mosaic_0001>

<llo_original>
// kernel: qlayer_forward.1
$region0: #{qlayer_forward.1}
  #allocation0 [shape = 'u32[]', space=smem, size = 0x4, offset = 0x4, fixed_abs, tag = 'smem constant byte address 0x4 - core index']
  #allocation1 [shape = 'u32[144,128]{1,0:T(1,128)}', space=vmem, size = 0x12000, scoped, tag = 'internal scratch']
  %s0 = inlined_call_operand.hbm [shape: f32[8,32], index: 0, kind: input, shape index: {}]
  %s1 = inlined_call_operand.hbm [shape: f32[32,32], index: 1, kind: input, shape index: {}]
  %s2 = inlined_call_operand.vmem [shape: f32[1,32], index: 2, kind: input, shape index: {}]
  %s3 = inlined_call_operand.hbm [shape: f32[8,32], index: 3, kind: output, shape index: {}]
  %s4 = sld [smem:[#allocation0]]
  $region30: #{qlayer_forward.1} parent=0
    _
  %s6 = ssub.s32 1, %s4
  %s7 = scalar_select 0, %s6, %s4
  $region1: #{qlayer_forward.1} parent=0
    #allocation2 [shape = 'u8[4096]{0}', space=vmem, size = 0x1000, scoped, tag = 'input window, operand 0, single buffered']
    #allocation3 [shape = 's32[1]{0}', space=sflag, size = 0x4, scoped, tag = 'scoped memory for qlayer_forward.1']
    #allocation4 [shape = 's32[1]{0}', space=sflag, size = 0x4, scoped, tag = 'scoped memory for qlayer_forward.1']
    #allocation5 [shape = 'u8[16384]{0}', space=vmem, size = 0x4000, scoped, tag = 'input window, operand 1, single buffered']
    #allocation6 [shape = 's32[1]{0}', space=sflag, size = 0x4, scoped, tag = 'scoped memory for qlayer_forward.1']
    #allocation7 [shape = 'u8[4096]{0}', space=vmem, size = 0x1000, scoped, tag = 'output window, operand 0, single buffered']
    %8 = vsyncpa [#allocation3], 0
    %9 = vsyncpa [#allocation6], 0
    %10 = vsyncpa [#allocation4], 0
    // Predicated region
    $region2: #{qlayer_forward.1} parent=1 // pred_check
      _
    $region3: #{qlayer_forward.1} parent=1 // pred_check_branch
      %12 = sbr.rel (0) target = $region5
    $region4: #{qlayer_forward.1} parent=1 // pred_region
      %s14 = ssub.s32 128, 128
      %15 = vsyncadd [#allocation3], %s14
      %s17 = sshll.u32 [#allocation2], 4
      %s18 = int_to_ptr.vmem [resolvable:$true] %s17
      %20 = dma.hbm_to_vmem [thread:$0]  %s0, 128, %s18, [#allocation3]
    $region5: #{qlayer_forward.1} parent=1 // pred_fallthru
      _
    // Predicated region
    $region6: #{qlayer_forward.1} parent=1 // pred_check
      _
    $region7: #{qlayer_forward.1} parent=1 // pred_check_branch
      %22 = sbr.rel (0) target = $region9
    $region8: #{qlayer_forward.1} parent=1 // pred_region
      %s24 = ssub.s32 512, 512
      %25 = vsyncadd [#allocation6], %s24
      %s26 = sshll.u32 [#allocation5], 4
      %s27 = int_to_ptr.vmem [resolvable:$true] %s26
      %32 = dma.hbm_to_vmem [thread:$0]  %s1, 512, %s27, [#allocation6], 128, 128, 8
    $region9: #{qlayer_forward.1} parent=1 // pred_fallthru
      _
    // Predicated region
    $region10: #{qlayer_forward.1} parent=1 // pred_check
      _
    $region11: #{qlayer_forward.1} parent=1 // pred_check_branch
      %34 = sbr.rel (0) target = $region13
    $region12: #{qlayer_forward.1} parent=1 // pred_region
      _
    $region13: #{qlayer_forward.1} parent=1 // pred_fallthru
      _
    // Predicated region
    $region14: #{qlayer_forward.1} parent=1 // pred_check
      _
    $region15: #{qlayer_forward.1} parent=1 // pred_check_branch
      %36 = sbr.rel (0) target = $region17
    $region16: #{qlayer_forward.1} parent=1 // pred_region
      %37 = dma.done [#allocation3], 128
    $region17: #{qlayer_forward.1} parent=1 // pred_fallthru
      _
    // Predicated region
    $region18: #{qlayer_forward.1} parent=1 // pred_check
      _
    $region19: #{qlayer_forward.1} parent=1 // pred_check_branch
      %39 = sbr.rel (0) target = $region21
    $region20: #{qlayer_forward.1} parent=1 // pred_region
      %40 = dma.done [#allocation6], 512
    $region21: #{qlayer_forward.1} parent=1 // pred_fallthru
      _
    %v41 = vld [vmem:[#allocation2] sm:$0xff]
    %v42 = vld [vmem:[#allocation5] sm:$0xff]
    %v43 = vld [vmem:[#allocation5 + $0x8] sm:$0xff]
    %v44 = vld [vmem:[#allocation5 + $0x10] sm:$0xff]
    %v45 = vld [vmem:[#allocation5 + $0x18] sm:$0xff]
    %v46 = vld [vmem:[%s2] sm:$0x1]
    %v48 = vlaneseq
    %v49 = vshrl.u32 %v48, 7
    %v50 = vsub.s32 0, %v49
    %v51 = vrot.slane %v46, %v50
    %vm53 = vcmask 261120
    %v55 = vsel %vm53, %v41, 0
    %57 = vmatprep.subr.mxu0 0.0
    %58 = vmatpush1.msra.mxu0 0.0
    %59 = vmatprep.subr.mxu0 0.0
    %60 = vmatpush1.msra.mxu0 0.0
    %61 = vmatprep.subr.mxu0 0.0
    %62 = vmatpush1.msra.mxu0 0.0
    %63 = vmatprep.subr.mxu0 0.0
    %64 = vmatpush1.msra.mxu0 0.0
    %65 = vmatprep.subr.mxu0 0.0
    %66 = vmatpush1.msra.mxu0 0.0
    %67 = vmatprep.subr.mxu0 0.0
    %68 = vmatpush1.msra.mxu0 0.0
    %69 = vmatprep.subr.mxu0 0.0
    %70 = vmatpush1.msra.mxu0 0.0
    %71 = vmatprep.subr.mxu0 0.0
    %72 = vmatpush1.msra.mxu0 0.0
    %73 = vmatprep.subr.mxu0 0.0
    %74 = vmatpush1.msra.mxu0 0.0
    %75 = vmatprep.subr.mxu0 0.0
    %76 = vmatpush1.msra.mxu0 0.0
    %77 = vmatprep.subr.mxu0 0.0
    %78 = vmatpush1.msra.mxu0 0.0
    %79 = vmatprep.subr.mxu0 0.0
    %80 = vmatpush1.msra.mxu0 0.0
    %81 = vmatprep.subr.mxu0 0.0
    %82 = vmatpush1.msra.mxu0 %v45
    %83 = vmatprep.subr.mxu0 0.0
    %84 = vmatpush1.msra.mxu0 %v44
    %85 = vmatprep.subr.mxu0 0.0
    %86 = vmatpush1.msra.mxu0 %v43
    %87 = vmatprep.subr.mxu0 0.0
    %88 = vmatpush1.msra.mxu0 %v42
    %89 = vmatprep.subr.mxu0 0.0
    %90 = vmatpush2.msra.mxu0 0.0
    %91 = vmatprep.subr.mxu0 0.0
    %92 = vmatpush2.msra.mxu0 0.0
    %93 = vmatprep.subr.mxu0 0.0
    %94 = vmatpush2.msra.mxu0 0.0
    %95 = vmatprep.subr.mxu0 0.0
    %96 = vmatpush2.msra.mxu0 0.0
    %97 = vmatprep.subr.mxu0 0.0
    %98 = vmatpush2.msra.mxu0 0.0
    %99 = vmatprep.subr.mxu0 0.0
    %100 = vmatpush2.msra.mxu0 0.0
    %101 = vmatprep.subr.mxu0 0.0
    %102 = vmatpush2.msra.mxu0 0.0
    %103 = vmatprep.subr.mxu0 0.0
    %104 = vmatpush2.msra.mxu0 0.0
    %105 = vmatprep.subr.mxu0 0.0
    %106 = vmatpush2.msra.mxu0 0.0
    %107 = vmatprep.subr.mxu0 0.0
    %108 = vmatpush2.msra.mxu0 0.0
    %109 = vmatprep.subr.mxu0 0.0
    %110 = vmatpush2.msra.mxu0 0.0
    %111 = vmatprep.subr.mxu0 0.0
    %112 = vmatpush2.msra.mxu0 0.0
    %113 = vmatprep.subr.mxu0 0.0
    %114 = vmatpush2.msra.mxu0 0.0
    %115 = vmatprep.subr.mxu0 0.0
    %116 = vmatpush2.msra.mxu0 0.0
    %117 = vmatprep.subr.mxu0 0.0
    %118 = vmatpush2.msra.mxu0 0.0
    %119 = vmatprep.subr.mxu0 0.0
    %120 = vmatpush2.msra.mxu0 0.0
    %121 = vmatprep.mubr.f32.mxu0 0.0
    %122 = vmatmul.mubr.f32.gmra.mxu0 %v55
    %v123 = vpop.f32.mrf.mxu0
    %v124 = vadd.f32 %v51, %v123
    %v125 = vpop.f32.mrf.mxu0
    %126 = vdwg.mxu0
    %127 = vst.msk [vmem:[#allocation7] sm:$0xff] %vm53, %v124
    // Predicated region
    $region22: #{qlayer_forward.1} parent=1 // pred_check
      _
    $region23: #{qlayer_forward.1} parent=1 // pred_check_branch
      %129 = sbr.rel (0) target = $region25
    $region24: #{qlayer_forward.1} parent=1 // pred_region
      %s131 = ssub.s32 128, 128
      %132 = vsyncadd [#allocation4], %s131
      %s134 = sshll.u32 [#allocation7], 4
      %s135 = int_to_ptr.vmem [resolvable:$true] %s134
      %137 = dma.vmem_to_hbm [thread:$0]  %s135, 128, %s3, [#allocation4]
    $region25: #{qlayer_forward.1} parent=1 // pred_fallthru
      _
    // Predicated region
    $region26: #{qlayer_forward.1} parent=1 // pred_check
      _
    $region27: #{qlayer_forward.1} parent=1 // pred_check_branch
      %139 = sbr.rel (0) target = $region29
    $region28: #{qlayer_forward.1} parent=1 // pred_region
      %140 = dma.done [#allocation4], 128
    $region29: #{qlayer_forward.1} parent=1 // pred_fallthru
      _
    %141 = vsyncpa [#allocation3], 1
    %142 = vsyncpa [#allocation6], 1
    %143 = vsyncpa [#allocation4], 1

</llo_original>
